<compile_context>
chip_gen: v7x
topology: tpu7x:2x2x1
jax: 0.10.0
libtpu: 0.0.40
codegen_flags: <defaults>
</compile_context>

<pallas_src>
import numpy as np
import jax
import jax.numpy as jnp
from jax.experimental import pallas as pl
from jax.experimental.pallas import tpu as pltpu


def _ifft2c_split_kernel(x_ref, mr_ref, mi_ref, o_ref):
    """One grid step: (tm, 2*HW) block of [real | imag] image rows times the
    real/imag operator halves -> four lane-dense MXU matmuls, f32 accumulation."""
    hw = mr_ref.shape[0]                       # static; HW is a multiple of 128
    mr = mr_ref[...]
    mi = mi_ref[...]
    xr = x_ref[:, :hw].astype(mr.dtype)
    xi = x_ref[:, hw:].astype(mr.dtype)
    yr = (jnp.dot(xr, mr, preferred_element_type=jnp.float32)
          - jnp.dot(xi, mi, preferred_element_type=jnp.float32))
    yi = (jnp.dot(xr, mi, preferred_element_type=jnp.float32)
          + jnp.dot(xi, mr, preferred_element_type=jnp.float32))
    o_ref[:, :hw] = yr.astype(o_ref.dtype)     # lane-aligned half stores
    o_ref[:, hw:] = yi.astype(o_ref.dtype)


def _build_operator_halves(H, W):
    """Mr, Mi (HW, HW) float32 such that, for xr/xi row-major flattened images,
      yr = xr @ Mr - xi @ Mi,  yi = xr @ Mi + xi @ Mr
    implements fftshift(ifft2(ifftshift(x), norm='ortho'))."""
    m = np.arange(H)
    DH = np.exp(2j * np.pi * np.outer(m, m) / H) / np.sqrt(H)
    n = np.arange(W)
    DW = np.exp(2j * np.pi * np.outer(n, n) / W) / np.sqrt(W)

    s_in_H, s_out_H = (H + 1) // 2, H // 2     # ifftshift / fftshift along H
    s_in_W, s_out_W = (W + 1) // 2, W // 2     # ifftshift / fftshift along W

    A = np.roll(np.roll(DH, s_out_H, axis=0), -s_in_H, axis=1)   # Y = A @ X
    B = np.roll(np.roll(DW, -s_in_W, axis=0), s_out_W, axis=1)   # Y = X @ B

    # vec(A @ X @ B) = kron(A, B^T) @ vec(X)  =>  y = x @ M^T
    MT = np.kron(A, B.T).T                                        # (HW, HW) complex
    return MT.real.astype(np.float32), MT.imag.astype(np.float32)


def _reference_ifft_layer(x):
    """Pure-JAX/XLA reference of the PyTorch forward (also used as fallback)."""
    xr = x[:, 0::2, :, :]
    xi = x[:, 1::2, :, :]
    c = xr + 1j * xi
    c = jnp.fft.ifftshift(c, axes=(-2, -1))
    y = jnp.fft.ifft2(c, norm="ortho")
    y = jnp.fft.fftshift(y, axes=(-2, -1))
    out = jnp.zeros_like(x)
    out = out.at[:, 0::2, :, :].set(jnp.real(y).astype(x.dtype))
    out = out.at[:, 1::2, :, :].set(jnp.imag(y).astype(x.dtype))
    return out


def ifft_layer(x, *, force_pallas=False, tm=None, operand_dtype=None):
    """Pallas equivalent of IFFT_layer.forward for NCHW float32 input with
    channels interleaved as (real0, imag0, real1, imag1, ...).

    operand_dtype: optional (e.g. jnp.bfloat16) to trade ~1e-3 accuracy for
    fewer MXU passes; default keeps float32 operands (1e-4 accurate).
    """
    N, C2, H, W = x.shape
    assert C2 % 2 == 0, "channel dim must interleave real/imag pairs"
    C = C2 // 2
    hw = H * W
    K = 2 * hw
    rows = N * C

    if hw % 128 != 0 or hw > 1024:
        # TODO(synk): batched separable (A @ X @ B) Pallas path for spatial sizes
        # whose dense (HW, HW) operator halves are not lane-aligned / too big for
        # VMEM; exact XLA FFT fallback keeps semantics meanwhile.
        return _reference_ifft_layer(x)

    mr_np, mi_np = _build_operator_halves(H, W)
    op_dtype = jnp.dtype(operand_dtype) if operand_dtype is not None else x.dtype
    mr = jnp.asarray(mr_np, dtype=op_dtype)
    mi = jnp.asarray(mi_np, dtype=op_dtype)

    # (N, C2, H, W) -> (N*C, 2*H*W): free row-major reshape; each row is the
    # [real | imag] pixels of one complex image.
    x2 = x.reshape(rows, K)

    if rows < 128 and not force_pallas:
        # Tiny batch: pallas_call launch/pipeline setup dominates a few-row GEMM
        # and wastes sublane/MXU rows; let XLA run the same four matmuls.
        xr = x2[:, :hw].astype(op_dtype)
        xi = x2[:, hw:].astype(op_dtype)
        yr = (jnp.dot(xr, mr, preferred_element_type=jnp.float32)
              - jnp.dot(xi, mi, preferred_element_type=jnp.float32))
        yi = (jnp.dot(xr, mi, preferred_element_type=jnp.float32)
              + jnp.dot(xi, mr, preferred_element_type=jnp.float32))
        y2 = jnp.concatenate([yr, yi], axis=1).astype(x.dtype)
        return y2.reshape(N, C2, H, W)

    # --- tile / VMEM planning ---
    op_itemsize = op_dtype.itemsize
    x_itemsize = x.dtype.itemsize
    op_bytes = 2 * hw * hw * op_itemsize * 2      # Mr + Mi, double-buffered
    per_row = 2 * K * x_itemsize * 2              # X block + out block, double-buffered
    budget = 40 << 20                             # VMEM plan for the pipeline
    if tm is None:
        cap = max(8, min(2048, int((budget - op_bytes) // per_row) // 8 * 8))
        if rows > cap:
            tm = cap
        elif rows >= 256:
            # At least 2 grid steps: v7x has 2 TensorCores sharing HBM; a 1-step
            # grid would idle one. Harmless extra step on v5e/v6e.
            tm = max(8, (pl.cdiv(rows, 2) + 7) // 8 * 8)
        else:
            tm = rows                              # single full-dim block (legal)
    grid = pl.cdiv(rows, tm)                       # ragged tail masked by Pallas

    vmem_need = op_bytes + tm * per_row
    vmem_limit = int(min(max(vmem_need + (vmem_need >> 2) + (2 << 20), 32 << 20),
                         56 << 20))               # covers v5e's 16 MiB default,
                                                  # stays under v7x's 64 MiB physical

    cost = pl.CostEstimate(
        flops=8 * rows * hw * hw,
        transcendentals=0,
        bytes_accessed=2 * rows * K * x_itemsize + 2 * hw * hw * op_itemsize,
    )

    y2 = pl.pallas_call(
        _ifft2c_split_kernel,
        out_shape=jax.ShapeDtypeStruct((rows, K), x.dtype),
        grid=(grid,),
        in_specs=[
            pl.BlockSpec((tm, K), lambda i: (i, 0)),     # image-row blocks (tiled)
            pl.BlockSpec((hw, hw), lambda i: (0, 0)),    # Mr (resident)
            pl.BlockSpec((hw, hw), lambda i: (0, 0)),    # Mi (resident)
        ],
        out_specs=pl.BlockSpec((tm, K), lambda i: (i, 0)),
        compiler_params=pltpu.CompilerParams(
            dimension_semantics=("parallel",),           # shards row blocks across TCs
            vmem_limit_bytes=vmem_limit,
        ),
        cost_estimate=cost,
    )(x2, mr, mi)

    return y2.reshape(N, C2, H, W)


if __name__ == "__main__":
    key = jax.random.PRNGKey(0)
    k1, k2 = jax.random.split(key)

    # Shape from the module spec: batch=2, 4 channels (2 complex images), 16x16.
    x_small = jax.random.normal(k1, (2, 4, 16, 16), dtype=jnp.float32)

    # 1) Force the Pallas kernel on the small input (so the kernel itself runs).
    pallas_fn = jax.jit(lambda v: ifft_layer(v, force_pallas=True))
    out_small = jax.block_until_ready(pallas_fn(x_small))
    np.testing.assert_allclose(np.asarray(out_small),
                               np.asarray(_reference_ifft_layer(x_small)),
                               rtol=1e-4, atol=1e-4)

    # 2) Default dispatch on the same tiny input (XLA fast path).
    out_fast = jax.block_until_ready(jax.jit(ifft_layer)(x_small))
    np.testing.assert_allclose(np.asarray(out_fast),
                               np.asarray(_reference_ifft_layer(x_small)),
                               rtol=1e-4, atol=1e-4)

    # 3) Moderate batch exercising the tiled Pallas path: rows = 75*4 = 300
    #    -> 2 parallel grid steps + a ragged (masked) last block, no host pad.
    x_med = jax.random.normal(k2, (75, 8, 16, 16), dtype=jnp.float32)
    out_med = jax.block_until_ready(jax.jit(ifft_layer)(x_med))
    np.testing.assert_allclose(np.asarray(out_med),
                               np.asarray(_reference_ifft_layer(x_med)),
                               rtol=1e-4, atol=1e-4)

    print("KERNEL_OK")
</pallas_src>

<mosaic_0001>
module attributes {stable_mosaic.version = 11 : i64} {
  func.func @_ifft2c_split_kernel(%arg0: i32, %arg1: memref<4x512xf32, #tpu.memory_space<vmem>>, %arg2: memref<256x256xf32, #tpu.memory_space<vmem>>, %arg3: memref<256x256xf32, #tpu.memory_space<vmem>>, %arg4: memref<4x512xf32, #tpu.memory_space<vmem>>) attributes {dimension_semantics = [#tpu.dimension_semantics<parallel>], iteration_bounds = array<i64: 1>, scalar_prefetch = 0 : i64, scratch_operands = 0 : i64, tpu.core_type = #tpu.core_type<tc>, window_params = [{transform_indices = @transform_0, window_bounds = array<i64: 4, 512>}, {pipeline_mode = #tpu.pipeline_mode<synchronous>, transform_indices = @transform_1, window_bounds = array<i64: 256, 256>}, {pipeline_mode = #tpu.pipeline_mode<synchronous>, transform_indices = @transform_2, window_bounds = array<i64: 256, 256>}, {transform_indices = @transform_3, window_bounds = array<i64: 4, 512>}]} {
    %c0 = arith.constant 0 : index
    %c0_0 = arith.constant 0 : index
    %0 = vector.load %arg2[%c0, %c0_0] : memref<256x256xf32, #tpu.memory_space<vmem>>, vector<256x256xf32>
    %c0_1 = arith.constant 0 : index
    %c0_2 = arith.constant 0 : index
    %1 = vector.load %arg3[%c0_1, %c0_2] : memref<256x256xf32, #tpu.memory_space<vmem>>, vector<256x256xf32>
    %c0_3 = arith.constant 0 : index
    %c0_4 = arith.constant 0 : index
    %2 = vector.load %arg1[%c0_3, %c0_4] : memref<4x512xf32, #tpu.memory_space<vmem>>, vector<4x256xf32>
    %c0_5 = arith.constant 0 : index
    %c256 = arith.constant 256 : index
    %3 = vector.load %arg1[%c0_5, %c256] : memref<4x512xf32, #tpu.memory_space<vmem>>, vector<4x256xf32>
    %cst = arith.constant dense<0.000000e+00> : vector<4x256xf32>
    %4 = tpu.matmul %2, %0, %cst {dimension_numbers = #tpu.dot_dimension_numbers<[1], [0], [0], [1], [0, 0, 1, 1], [], []>} : vector<4x256xf32>, vector<256x256xf32>, vector<4x256xf32> -> vector<4x256xf32>
    %cst_6 = arith.constant dense<0.000000e+00> : vector<4x256xf32>
    %5 = tpu.matmul %3, %1, %cst_6 {dimension_numbers = #tpu.dot_dimension_numbers<[1], [0], [0], [1], [0, 0, 1, 1], [], []>} : vector<4x256xf32>, vector<256x256xf32>, vector<4x256xf32> -> vector<4x256xf32>
    %6 = arith.subf %4, %5 : vector<4x256xf32>
    %cst_7 = arith.constant dense<0.000000e+00> : vector<4x256xf32>
    %7 = tpu.matmul %2, %1, %cst_7 {dimension_numbers = #tpu.dot_dimension_numbers<[1], [0], [0], [1], [0, 0, 1, 1], [], []>} : vector<4x256xf32>, vector<256x256xf32>, vector<4x256xf32> -> vector<4x256xf32>
    %cst_8 = arith.constant dense<0.000000e+00> : vector<4x256xf32>
    %8 = tpu.matmul %3, %0, %cst_8 {dimension_numbers = #tpu.dot_dimension_numbers<[1], [0], [0], [1], [0, 0, 1, 1], [], []>} : vector<4x256xf32>, vector<256x256xf32>, vector<4x256xf32> -> vector<4x256xf32>
    %9 = arith.addf %7, %8 : vector<4x256xf32>
    %c0_9 = arith.constant 0 : index
    %c0_10 = arith.constant 0 : index
    %10 = vector.load %arg4[%c0_9, %c0_10] : memref<4x512xf32, #tpu.memory_space<vmem>>, vector<4x256xf32>
    tpu.vector_store %arg4[%c0_9, %c0_10], %6 {strides = array<i32>} : memref<4x512xf32, #tpu.memory_space<vmem>>, vector<4x256xf32>,
    %c0_11 = arith.constant 0 : index
    %c256_12 = arith.constant 256 : index
    %11 = vector.load %arg4[%c0_11, %c256_12] : memref<4x512xf32, #tpu.memory_space<vmem>>, vector<4x256xf32>
    tpu.vector_store %arg4[%c0_11, %c256_12], %9 {strides = array<i32>} : memref<4x512xf32, #tpu.memory_space<vmem>>, vector<4x256xf32>,
    return
  }
  func.func @transform_0(%arg0: i32) -> (i32, i32) {
    %c0_i32 = arith.constant 0 : i32
    %c0_i32_0 = arith.constant 0 : i32
    return %arg0, %c0_i32 : i32, i32
  }
  func.func @transform_1(%arg0: i32) -> (i32, i32) {
    %c0_i32 = arith.constant 0 : i32
    %c0_i32_0 = arith.constant 0 : i32
    %c0_i32_1 = arith.constant 0 : i32
    return %c0_i32, %c0_i32_0 : i32, i32
  }
  func.func @transform_2(%arg0: i32) -> (i32, i32) {
    %c0_i32 = arith.constant 0 : i32
    %c0_i32_0 = arith.constant 0 : i32
    %c0_i32_1 = arith.constant 0 : i32
    return %c0_i32, %c0_i32_0 : i32, i32
  }
  func.func @transform_3(%arg0: i32) -> (i32, i32) {
    %c0_i32 = arith.constant 0 : i32
    %c0_i32_0 = arith.constant 0 : i32
    return %arg0, %c0_i32 : i32, i32
  }
}

</mosaic_0001>

<llo_original>
// kernel: _lambda_.1
$region0: #{_lambda_.1}
  #allocation0 [shape = 'u32[]', space=smem, size = 0x4, offset = 0x4, fixed_abs, tag = 'smem constant byte address 0x4 - core index']
  #allocation1 [shape = 'u32[144,128]{1,0:T(1,128)}', space=vmem, size = 0x12000, scoped, tag = 'internal scratch']
  %s0 = inlined_call_operand.vmem [shape: f32[4,512], index: 0, kind: input, shape index: {}]
  %s1 = inlined_call_operand.hbm [shape: f32[256,256], index: 1, kind: input, shape index: {}]
  %s2 = inlined_call_operand.hbm [shape: f32[256,256], index: 2, kind: input, shape index: {}]
  %s3 = inlined_call_operand.vmem [shape: f32[4,512], index: 3, kind: output, shape index: {}]
  %s4 = sld [smem:[#allocation0]]
  $region30: #{_lambda_.1} parent=0
    _
  %s6 = ssub.s32 1, %s4
  %s7 = scalar_select 0, %s6, %s4
  $region1: #{_lambda_.1} parent=0
    #allocation2 [shape = 'u8[262144]{0}', space=vmem, size = 0x40000, scoped, tag = 'input window, operand 1, single buffered']
    #allocation3 [shape = 's32[1]{0}', space=sflag, size = 0x4, scoped, tag = 'scoped memory for _lambda_.1']
    #allocation4 [shape = 'u8[262144]{0}', space=vmem, size = 0x40000, scoped, tag = 'input window, operand 2, single buffered']
    #allocation5 [shape = 's32[1]{0}', space=sflag, size = 0x4, scoped, tag = 'scoped memory for _lambda_.1']
    %8 = vsyncpa [#allocation3], 0
    %9 = vsyncpa [#allocation5], 0
    // Predicated region
    $region2: #{_lambda_.1} parent=1 // pred_check
      _
    $region3: #{_lambda_.1} parent=1 // pred_check_branch
      %11 = sbr.rel (0) target = $region5
    $region4: #{_lambda_.1} parent=1 // pred_region
      _
    $region5: #{_lambda_.1} parent=1 // pred_fallthru
      _
    // Predicated region
    $region6: #{_lambda_.1} parent=1 // pred_check
      _
    $region7: #{_lambda_.1} parent=1 // pred_check_branch
      %13 = sbr.rel (0) target = $region9
    $region8: #{_lambda_.1} parent=1 // pred_region
      %s15 = ssub.s32 8192, 8192
      %16 = vsyncadd [#allocation3], %s15
      %s17 = sshll.u32 [#allocation2], 4
      %s18 = int_to_ptr.vmem [resolvable:$true] %s17
      %23 = dma.hbm_to_vmem [thread:$0]  %s1, 8192, %s18, [#allocation3], 256, 256, 16
    $region9: #{_lambda_.1} parent=1 // pred_fallthru
      _
    // Predicated region
    $region10: #{_lambda_.1} parent=1 // pred_check
      _
    $region11: #{_lambda_.1} parent=1 // pred_check_branch
      %25 = sbr.rel (0) target = $region13
    $region12: #{_lambda_.1} parent=1 // pred_region
      %s27 = ssub.s32 8192, 8192
      %28 = vsyncadd [#allocation5], %s27
      %s29 = sshll.u32 [#allocation4], 4
      %s30 = int_to_ptr.vmem [resolvable:$true] %s29
      %35 = dma.hbm_to_vmem [thread:$0]  %s2, 8192, %s30, [#allocation5], 256, 256, 16
    $region13: #{_lambda_.1} parent=1 // pred_fallthru
      _
    // Predicated region
    $region14: #{_lambda_.1} parent=1 // pred_check
      _
    $region15: #{_lambda_.1} parent=1 // pred_check_branch
      %37 = sbr.rel (0) target = $region17
    $region16: #{_lambda_.1} parent=1 // pred_region
      %38 = dma.done [#allocation3], 8192
    $region17: #{_lambda_.1} parent=1 // pred_fallthru
      _
    // Predicated region
    $region18: #{_lambda_.1} parent=1 // pred_check
      _
    $region19: #{_lambda_.1} parent=1 // pred_check_branch
      %40 = sbr.rel (0) target = $region21
    $region20: #{_lambda_.1} parent=1 // pred_region
      %41 = dma.done [#allocation5], 8192
    $region21: #{_lambda_.1} parent=1 // pred_fallthru
      _
    %v42 = vld [vmem:[#allocation2] sm:$0xff]
    %v43 = vld [vmem:[#allocation2 + $0x8] sm:$0xff]
    %v44 = vld [vmem:[#allocation2 + $0x10] sm:$0xff]
    %v45 = vld [vmem:[#allocation2 + $0x18] sm:$0xff]
    %v46 = vld [vmem:[#allocation2 + $0x20] sm:$0xff]
    %v47 = vld [vmem:[#allocation2 + $0x28] sm:$0xff]
    %v48 = vld [vmem:[#allocation2 + $0x30] sm:$0xff]
    %v49 = vld [vmem:[#allocation2 + $0x38] sm:$0xff]
    %v50 = vld [vmem:[#allocation2 + $0x40] sm:$0xff]
    %v51 = vld [vmem:[#allocation2 + $0x48] sm:$0xff]
    %v52 = vld [vmem:[#allocation2 + $0x50] sm:$0xff]
    %v53 = vld [vmem:[#allocation2 + $0x58] sm:$0xff]
    %v54 = vld [vmem:[#allocation2 + $0x60] sm:$0xff]
    %v55 = vld [vmem:[#allocation2 + $0x68] sm:$0xff]
    %v56 = vld [vmem:[#allocation2 + $0x70] sm:$0xff]
    %v57 = vld [vmem:[#allocation2 + $0x78] sm:$0xff]
    %v58 = vld [vmem:[#allocation2 + $0x80] sm:$0xff]
    %v59 = vld [vmem:[#allocation2 + $0x88] sm:$0xff]
    %v60 = vld [vmem:[#allocation2 + $0x90] sm:$0xff]
    %v61 = vld [vmem:[#allocation2 + $0x98] sm:$0xff]
    %v62 = vld [vmem:[#allocation2 + $0xa0] sm:$0xff]
    %v63 = vld [vmem:[#allocation2 + $0xa8] sm:$0xff]
    %v64 = vld [vmem:[#allocation2 + $0xb0] sm:$0xff]
    %v65 = vld [vmem:[#allocation2 + $0xb8] sm:$0xff]
    %v66 = vld [vmem:[#allocation2 + $0xc0] sm:$0xff]
    %v67 = vld [vmem:[#allocation2 + $0xc8] sm:$0xff]
    %v68 = vld [vmem:[#allocation2 + $0xd0] sm:$0xff]
    %v69 = vld [vmem:[#allocation2 + $0xd8] sm:$0xff]
    %v70 = vld [vmem:[#allocation2 + $0xe0] sm:$0xff]
    %v71 = vld [vmem:[#allocation2 + $0xe8] sm:$0xff]
    %v72 = vld [vmem:[#allocation2 + $0xf0] sm:$0xff]
    %v73 = vld [vmem:[#allocation2 + $0xf8] sm:$0xff]
    %v74 = vld [vmem:[#allocation2 + $0x100] sm:$0xff]
    %v75 = vld [vmem:[#allocation2 + $0x108] sm:$0xff]
    %v76 = vld [vmem:[#allocation2 + $0x110] sm:$0xff]
    %v77 = vld [vmem:[#allocation2 + $0x118] sm:$0xff]
    %v78 = vld [vmem:[#allocation2 + $0x120] sm:$0xff]
    %v79 = vld [vmem:[#allocation2 + $0x128] sm:$0xff]
    %v80 = vld [vmem:[#allocation2 + $0x130] sm:$0xff]
    %v81 = vld [vmem:[#allocation2 + $0x138] sm:$0xff]
    %v82 = vld [vmem:[#allocation2 + $0x140] sm:$0xff]
    %v83 = vld [vmem:[#allocation2 + $0x148] sm:$0xff]
    %v84 = vld [vmem:[#allocation2 + $0x150] sm:$0xff]
    %v85 = vld [vmem:[#allocation2 + $0x158] sm:$0xff]
    %v86 = vld [vmem:[#allocation2 + $0x160] sm:$0xff]
    %v87 = vld [vmem:[#allocation2 + $0x168] sm:$0xff]
    %v88 = vld [vmem:[#allocation2 + $0x170] sm:$0xff]
    %v89 = vld [vmem:[#allocation2 + $0x178] sm:$0xff]
    %v90 = vld [vmem:[#allocation2 + $0x180] sm:$0xff]
    %v91 = vld [vmem:[#allocation2 + $0x188] sm:$0xff]
    %v92 = vld [vmem:[#allocation2 + $0x190] sm:$0xff]
    %v93 = vld [vmem:[#allocation2 + $0x198] sm:$0xff]
    %v94 = vld [vmem:[#allocation2 + $0x1a0] sm:$0xff]
    %v95 = vld [vmem:[#allocation2 + $0x1a8] sm:$0xff]
    %v96 = vld [vmem:[#allocation2 + $0x1b0] sm:$0xff]
    %v97 = vld [vmem:[#allocation2 + $0x1b8] sm:$0xff]
    %v98 = vld [vmem:[#allocation2 + $0x1c0] sm:$0xff]
    %v99 = vld [vmem:[#allocation2 + $0x1c8] sm:$0xff]
    %v100 = vld [vmem:[#allocation2 + $0x1d0] sm:$0xff]
    %v101 = vld [vmem:[#allocation2 + $0x1d8] sm:$0xff]
    %v102 = vld [vmem:[#allocation2 + $0x1e0] sm:$0xff]
    %v103 = vld [vmem:[#allocation2 + $0x1e8] sm:$0xff]
    %v104 = vld [vmem:[#allocation2 + $0x1f0] sm:$0xff]
    %v105 = vld [vmem:[#allocation2 + $0x1f8] sm:$0xff]
    %v106 = vld [vmem:[#allocation4] sm:$0xff]
    %v107 = vld [vmem:[#allocation4 + $0x8] sm:$0xff]
    %v108 = vld [vmem:[#allocation4 + $0x10] sm:$0xff]
    %v109 = vld [vmem:[#allocation4 + $0x18] sm:$0xff]
    %v110 = vld [vmem:[#allocation4 + $0x20] sm:$0xff]
    %v111 = vld [vmem:[#allocation4 + $0x28] sm:$0xff]
    %v112 = vld [vmem:[#allocation4 + $0x30] sm:$0xff]
    %v113 = vld [vmem:[#allocation4 + $0x38] sm:$0xff]
    %v114 = vld [vmem:[#allocation4 + $0x40] sm:$0xff]
    %v115 = vld [vmem:[#allocation4 + $0x48] sm:$0xff]
    %v116 = vld [vmem:[#allocation4 + $0x50] sm:$0xff]
    %v117 = vld [vmem:[#allocation4 + $0x58] sm:$0xff]
    %v118 = vld [vmem:[#allocation4 + $0x60] sm:$0xff]
    %v119 = vld [vmem:[#allocation4 + $0x68] sm:$0xff]
    %v120 = vld [vmem:[#allocation4 + $0x70] sm:$0xff]
    %v121 = vld [vmem:[#allocation4 + $0x78] sm:$0xff]
    %v122 = vld [vmem:[#allocation4 + $0x80] sm:$0xff]
    %v123 = vld [vmem:[#allocation4 + $0x88] sm:$0xff]
    %v124 = vld [vmem:[#allocation4 + $0x90] sm:$0xff]
    %v125 = vld [vmem:[#allocation4 + $0x98] sm:$0xff]
    %v126 = vld [vmem:[#allocation4 + $0xa0] sm:$0xff]
    %v127 = vld [vmem:[#allocation4 + $0xa8] sm:$0xff]
    %v128 = vld [vmem:[#allocation4 + $0xb0] sm:$0xff]
    %v129 = vld [vmem:[#allocation4 + $0xb8] sm:$0xff]
    %v130 = vld [vmem:[#allocation4 + $0xc0] sm:$0xff]
    %v131 = vld [vmem:[#allocation4 + $0xc8] sm:$0xff]
    %v132 = vld [vmem:[#allocation4 + $0xd0] sm:$0xff]
    %v133 = vld [vmem:[#allocation4 + $0xd8] sm:$0xff]
    %v134 = vld [vmem:[#allocation4 + $0xe0] sm:$0xff]
    %v135 = vld [vmem:[#allocation4 + $0xe8] sm:$0xff]
    %v136 = vld [vmem:[#allocation4 + $0xf0] sm:$0xff]
    %v137 = vld [vmem:[#allocation4 + $0xf8] sm:$0xff]
    %v138 = vld [vmem:[#allocation4 + $0x100] sm:$0xff]
    %v139 = vld [vmem:[#allocation4 + $0x108] sm:$0xff]
    %v140 = vld [vmem:[#allocation4 + $0x110] sm:$0xff]
    %v141 = vld [vmem:[#allocation4 + $0x118] sm:$0xff]
    %v142 = vld [vmem:[#allocation4 + $0x120] sm:$0xff]
    %v143 = vld [vmem:[#allocation4 + $0x128] sm:$0xff]
    %v144 = vld [vmem:[#allocation4 + $0x130] sm:$0xff]
    %v145 = vld [vmem:[#allocation4 + $0x138] sm:$0xff]
    %v146 = vld [vmem:[#allocation4 + $0x140] sm:$0xff]
    %v147 = vld [vmem:[#allocation4 + $0x148] sm:$0xff]
    %v148 = vld [vmem:[#allocation4 + $0x150] sm:$0xff]
    %v149 = vld [vmem:[#allocation4 + $0x158] sm:$0xff]
    %v150 = vld [vmem:[#allocation4 + $0x160] sm:$0xff]
    %v151 = vld [vmem:[#allocation4 + $0x168] sm:$0xff]
    %v152 = vld [vmem:[#allocation4 + $0x170] sm:$0xff]
    %v153 = vld [vmem:[#allocation4 + $0x178] sm:$0xff]
    %v154 = vld [vmem:[#allocation4 + $0x180] sm:$0xff]
    %v155 = vld [vmem:[#allocation4 + $0x188] sm:$0xff]
    %v156 = vld [vmem:[#allocation4 + $0x190] sm:$0xff]
    %v157 = vld [vmem:[#allocation4 + $0x198] sm:$0xff]
    %v158 = vld [vmem:[#allocation4 + $0x1a0] sm:$0xff]
    %v159 = vld [vmem:[#allocation4 + $0x1a8] sm:$0xff]
    %v160 = vld [vmem:[#allocation4 + $0x1b0] sm:$0xff]
    %v161 = vld [vmem:[#allocation4 + $0x1b8] sm:$0xff]
    %v162 = vld [vmem:[#allocation4 + $0x1c0] sm:$0xff]
    %v163 = vld [vmem:[#allocation4 + $0x1c8] sm:$0xff]
    %v164 = vld [vmem:[#allocation4 + $0x1d0] sm:$0xff]
    %v165 = vld [vmem:[#allocation4 + $0x1d8] sm:$0xff]
    %v166 = vld [vmem:[#allocation4 + $0x1e0] sm:$0xff]
    %v167 = vld [vmem:[#allocation4 + $0x1e8] sm:$0xff]
    %v168 = vld [vmem:[#allocation4 + $0x1f0] sm:$0xff]
    %v169 = vld [vmem:[#allocation4 + $0x1f8] sm:$0xff]
    %v170 = vld [vmem:[%s0] sm:$0xff]
    %v171 = vld [vmem:[%s0 + $0x8] sm:$0xff]
    %v173 = vcombine.high %v170, %v170
    %175 = vmatprep.subr.mxu0 %v43
    %176 = vmatpush1.msra.mxu0 %v42
    %177 = vmatprep.subr.mxu0 %v45
    %178 = vmatpush1.msra.mxu0 %v44
    %179 = vmatprep.subr.mxu0 %v47
    %180 = vmatpush1.msra.mxu0 %v46
    %181 = vmatprep.subr.mxu0 %v49
    %182 = vmatpush1.msra.mxu0 %v48
    %183 = vmatprep.subr.mxu0 %v51
    %184 = vmatpush1.msra.mxu0 %v50
    %185 = vmatprep.subr.mxu0 %v53
    %186 = vmatpush1.msra.mxu0 %v52
    %187 = vmatprep.subr.mxu0 %v55
    %188 = vmatpush1.msra.mxu0 %v54
    %189 = vmatprep.subr.mxu0 %v57
    %190 = vmatpush1.msra.mxu0 %v56
    %191 = vmatprep.subr.mxu0 %v59
    %192 = vmatpush1.msra.mxu0 %v58
    %193 = vmatprep.subr.mxu0 %v61
    %194 = vmatpush1.msra.mxu0 %v60
    %195 = vmatprep.subr.mxu0 %v63
    %196 = vmatpush1.msra.mxu0 %v62
    %197 = vmatprep.subr.mxu0 %v65
    %198 = vmatpush1.msra.mxu0 %v64
    %199 = vmatprep.subr.mxu0 %v67
    %200 = vmatpush1.msra.mxu0 %v66
    %201 = vmatprep.subr.mxu0 %v69
    %202 = vmatpush1.msra.mxu0 %v68
    %203 = vmatprep.subr.mxu0 %v71
    %204 = vmatpush1.msra.mxu0 %v70
    %205 = vmatprep.subr.mxu0 %v73
    %206 = vmatpush1.msra.mxu0 %v72
    %207 = vmatprep.subr.mxu0 %v75
    %208 = vmatpush1.msra.mxu0 %v74
    %209 = vmatprep.subr.mxu0 %v77
    %210 = vmatpush1.msra.mxu0 %v76
    %211 = vmatprep.subr.mxu0 %v79
    %212 = vmatpush1.msra.mxu0 %v78
    %213 = vmatprep.subr.mxu0 %v81
    %214 = vmatpush1.msra.mxu0 %v80
    %215 = vmatprep.subr.mxu0 %v83
    %216 = vmatpush1.msra.mxu0 %v82
    %217 = vmatprep.subr.mxu0 %v85
    %218 = vmatpush1.msra.mxu0 %v84
    %219 = vmatprep.subr.mxu0 %v87
    %220 = vmatpush1.msra.mxu0 %v86
    %221 = vmatprep.subr.mxu0 %v89
    %222 = vmatpush1.msra.mxu0 %v88
    %223 = vmatprep.subr.mxu0 %v91
    %224 = vmatpush1.msra.mxu0 %v90
    %225 = vmatprep.subr.mxu0 %v93
    %226 = vmatpush1.msra.mxu0 %v92
    %227 = vmatprep.subr.mxu0 %v95
    %228 = vmatpush1.msra.mxu0 %v94
    %229 = vmatprep.subr.mxu0 %v97
    %230 = vmatpush1.msra.mxu0 %v96
    %231 = vmatprep.subr.mxu0 %v99
    %232 = vmatpush1.msra.mxu0 %v98
    %233 = vmatprep.subr.mxu0 %v101
    %234 = vmatpush1.msra.mxu0 %v100
    %235 = vmatprep.subr.mxu0 %v103
    %236 = vmatpush1.msra.mxu0 %v102
    %237 = vmatprep.subr.mxu0 %v105
    %238 = vmatpush1.msra.mxu0 %v104
    %239 = vmatprep.mubr.f32.mxu0 %v173
    %240 = vmatmul.mubr.f32.gmra.mrb[0].mxu0 %v170
    %v241 = vpop.f32.mrb[0].mxu0
    %v242 = vadd.f32 0.0, %v241
    %v243 = vpop.f32.mrb[0].mxu0
    %v244 = vadd.f32 0.0, %v243
    %245 = vdwg.mxu0
    %v247 = vcombine.high %v171, %v171
    %249 = vmatprep.subr.mxu0 %v107
    %250 = vmatpush1.msra.mxu0 %v106
    %251 = vmatprep.subr.mxu0 %v109
    %252 = vmatpush1.msra.mxu0 %v108
    %253 = vmatprep.subr.mxu0 %v111
    %254 = vmatpush1.msra.mxu0 %v110
    %255 = vmatprep.subr.mxu0 %v113
    %256 = vmatpush1.msra.mxu0 %v112
    %257 = vmatprep.subr.mxu0 %v115
    %258 = vmatpush1.msra.mxu0 %v114
    %259 = vmatprep.subr.mxu0 %v117
    %260 = vmatpush1.msra.mxu0 %v116
    %261 = vmatprep.subr.mxu0 %v119
    %262 = vmatpush1.msra.mxu0 %v118
    %263 = vmatprep.subr.mxu0 %v121
    %264 = vmatpush1.msra.mxu0 %v120
    %265 = vmatprep.subr.mxu0 %v123
    %266 = vmatpush1.msra.mxu0 %v122
    %267 = vmatprep.subr.mxu0 %v125
    %268 = vmatpush1.msra.mxu0 %v124
    %269 = vmatprep.subr.mxu0 %v127
    %270 = vmatpush1.msra.mxu0 %v126
    %271 = vmatprep.subr.mxu0 %v129
    %272 = vmatpush1.msra.mxu0 %v128
    %273 = vmatprep.subr.mxu0 %v131
    %274 = vmatpush1.msra.mxu0 %v130
    %275 = vmatprep.subr.mxu0 %v133
    %276 = vmatpush1.msra.mxu0 %v132
    %277 = vmatprep.subr.mxu0 %v135
    %278 = vmatpush1.msra.mxu0 %v134
    %279 = vmatprep.subr.mxu0 %v137
    %280 = vmatpush1.msra.mxu0 %v136
    %281 = vmatprep.subr.mxu0 %v139
    %282 = vmatpush1.msra.mxu0 %v138
    %283 = vmatprep.subr.mxu0 %v141
    %284 = vmatpush1.msra.mxu0 %v140
    %285 = vmatprep.subr.mxu0 %v143
    %286 = vmatpush1.msra.mxu0 %v142
    %287 = vmatprep.subr.mxu0 %v145
    %288 = vmatpush1.msra.mxu0 %v144
    %289 = vmatprep.subr.mxu0 %v147
    %290 = vmatpush1.msra.mxu0 %v146
    %291 = vmatprep.subr.mxu0 %v149
    %292 = vmatpush1.msra.mxu0 %v148
    %293 = vmatprep.subr.mxu0 %v151
    %294 = vmatpush1.msra.mxu0 %v150
    %295 = vmatprep.subr.mxu0 %v153
    %296 = vmatpush1.msra.mxu0 %v152
    %297 = vmatprep.subr.mxu0 %v155
    %298 = vmatpush1.msra.mxu0 %v154
    %299 = vmatprep.subr.mxu0 %v157
    %300 = vmatpush1.msra.mxu0 %v156
    %301 = vmatprep.subr.mxu0 %v159
    %302 = vmatpush1.msra.mxu0 %v158
    %303 = vmatprep.subr.mxu0 %v161
    %304 = vmatpush1.msra.mxu0 %v160
    %305 = vmatprep.subr.mxu0 %v163
    %306 = vmatpush1.msra.mxu0 %v162
    %307 = vmatprep.subr.mxu0 %v165
    %308 = vmatpush1.msra.mxu0 %v164
    %309 = vmatprep.subr.mxu0 %v167
    %310 = vmatpush1.msra.mxu0 %v166
    %311 = vmatprep.subr.mxu0 %v169
    %312 = vmatpush1.msra.mxu0 %v168
    %313 = vmatprep.mubr.f32.mxu0 %v247
    %314 = vmatmul.mubr.f32.gmra.mrb[0].mxu0 %v171
    %v315 = vpop.f32.mrb[0].mxu0
    %v316 = vadd.f32 0.0, %v315
    %v317 = vpop.f32.mrb[0].mxu0
    %v318 = vadd.f32 0.0, %v317
    %319 = vdwg.mxu0
    %v320 = vsub.f32 %v242, %v316
    %v321 = vsub.f32 %v244, %v318
    %322 = vmatprep.subr.mxu0 %v43
    %323 = vmatpush1.msra.mxu0 %v42
    %324 = vmatprep.subr.mxu0 %v45
    %325 = vmatpush1.msra.mxu0 %v44
    %326 = vmatprep.subr.mxu0 %v47
    %327 = vmatpush1.msra.mxu0 %v46
    %328 = vmatprep.subr.mxu0 %v49
    %329 = vmatpush1.msra.mxu0 %v48
    %330 = vmatprep.subr.mxu0 %v51
    %331 = vmatpush1.msra.mxu0 %v50
    %332 = vmatprep.subr.mxu0 %v53
    %333 = vmatpush1.msra.mxu0 %v52
    %334 = vmatprep.subr.mxu0 %v55
    %335 = vmatpush1.msra.mxu0 %v54
    %336 = vmatprep.subr.mxu0 %v57
    %337 = vmatpush1.msra.mxu0 %v56
    %338 = vmatprep.subr.mxu0 %v59
    %339 = vmatpush1.msra.mxu0 %v58
    %340 = vmatprep.subr.mxu0 %v61
    %341 = vmatpush1.msra.mxu0 %v60
    %342 = vmatprep.subr.mxu0 %v63
    %343 = vmatpush1.msra.mxu0 %v62
    %344 = vmatprep.subr.mxu0 %v65
    %345 = vmatpush1.msra.mxu0 %v64
    %346 = vmatprep.subr.mxu0 %v67
    %347 = vmatpush1.msra.mxu0 %v66
    %348 = vmatprep.subr.mxu0 %v69
    %349 = vmatpush1.msra.mxu0 %v68
    %350 = vmatprep.subr.mxu0 %v71
    %351 = vmatpush1.msra.mxu0 %v70
    %352 = vmatprep.subr.mxu0 %v73
    %353 = vmatpush1.msra.mxu0 %v72
    %354 = vmatprep.subr.mxu0 %v75
    %355 = vmatpush1.msra.mxu0 %v74
    %356 = vmatprep.subr.mxu0 %v77
    %357 = vmatpush1.msra.mxu0 %v76
    %358 = vmatprep.subr.mxu0 %v79
    %359 = vmatpush1.msra.mxu0 %v78
    %360 = vmatprep.subr.mxu0 %v81
    %361 = vmatpush1.msra.mxu0 %v80
    %362 = vmatprep.subr.mxu0 %v83
    %363 = vmatpush1.msra.mxu0 %v82
    %364 = vmatprep.subr.mxu0 %v85
    %365 = vmatpush1.msra.mxu0 %v84
    %366 = vmatprep.subr.mxu0 %v87
    %367 = vmatpush1.msra.mxu0 %v86
    %368 = vmatprep.subr.mxu0 %v89
    %369 = vmatpush1.msra.mxu0 %v88
    %370 = vmatprep.subr.mxu0 %v91
    %371 = vmatpush1.msra.mxu0 %v90
    %372 = vmatprep.subr.mxu0 %v93
    %373 = vmatpush1.msra.mxu0 %v92
    %374 = vmatprep.subr.mxu0 %v95
    %375 = vmatpush1.msra.mxu0 %v94
    %376 = vmatprep.subr.mxu0 %v97
    %377 = vmatpush1.msra.mxu0 %v96
    %378 = vmatprep.subr.mxu0 %v99
    %379 = vmatpush1.msra.mxu0 %v98
    %380 = vmatprep.subr.mxu0 %v101
    %381 = vmatpush1.msra.mxu0 %v100
    %382 = vmatprep.subr.mxu0 %v103
    %383 = vmatpush1.msra.mxu0 %v102
    %384 = vmatprep.subr.mxu0 %v105
    %385 = vmatpush1.msra.mxu0 %v104
    %386 = vmatprep.mubr.f32.mxu0 %v247
    %387 = vmatmul.mubr.f32.gmra.mrb[0].mxu0 %v171
    %v388 = vpop.f32.mrb[0].mxu0
    %v389 = vadd.f32 0.0, %v388
    %v390 = vpop.f32.mrb[0].mxu0
    %v391 = vadd.f32 0.0, %v390
    %392 = vdwg.mxu0
    %393 = vmatprep.subr.mxu0 %v107
    %394 = vmatpush1.msra.mxu0 %v106
    %395 = vmatprep.subr.mxu0 %v109
    %396 = vmatpush1.msra.mxu0 %v108
    %397 = vmatprep.subr.mxu0 %v111
    %398 = vmatpush1.msra.mxu0 %v110
    %399 = vmatprep.subr.mxu0 %v113
    %400 = vmatpush1.msra.mxu0 %v112
    %401 = vmatprep.subr.mxu0 %v115
    %402 = vmatpush1.msra.mxu0 %v114
    %403 = vmatprep.subr.mxu0 %v117
    %404 = vmatpush1.msra.mxu0 %v116
    %405 = vmatprep.subr.mxu0 %v119
    %406 = vmatpush1.msra.mxu0 %v118
    %407 = vmatprep.subr.mxu0 %v121
    %408 = vmatpush1.msra.mxu0 %v120
    %409 = vmatprep.subr.mxu0 %v123
    %410 = vmatpush1.msra.mxu0 %v122
    %411 = vmatprep.subr.mxu0 %v125
    %412 = vmatpush1.msra.mxu0 %v124
    %413 = vmatprep.subr.mxu0 %v127
    %414 = vmatpush1.msra.mxu0 %v126
    %415 = vmatprep.subr.mxu0 %v129
    %416 = vmatpush1.msra.mxu0 %v128
    %417 = vmatprep.subr.mxu0 %v131
    %418 = vmatpush1.msra.mxu0 %v130
    %419 = vmatprep.subr.mxu0 %v133
    %420 = vmatpush1.msra.mxu0 %v132
    %421 = vmatprep.subr.mxu0 %v135
    %422 = vmatpush1.msra.mxu0 %v134
    %423 = vmatprep.subr.mxu0 %v137
    %424 = vmatpush1.msra.mxu0 %v136
    %425 = vmatprep.subr.mxu0 %v139
    %426 = vmatpush1.msra.mxu0 %v138
    %427 = vmatprep.subr.mxu0 %v141
    %428 = vmatpush1.msra.mxu0 %v140
    %429 = vmatprep.subr.mxu0 %v143
    %430 = vmatpush1.msra.mxu0 %v142
    %431 = vmatprep.subr.mxu0 %v145
    %432 = vmatpush1.msra.mxu0 %v144
    %433 = vmatprep.subr.mxu0 %v147
    %434 = vmatpush1.msra.mxu0 %v146
    %435 = vmatprep.subr.mxu0 %v149
    %436 = vmatpush1.msra.mxu0 %v148
    %437 = vmatprep.subr.mxu0 %v151
    %438 = vmatpush1.msra.mxu0 %v150
    %439 = vmatprep.subr.mxu0 %v153
    %440 = vmatpush1.msra.mxu0 %v152
    %441 = vmatprep.subr.mxu0 %v155
    %442 = vmatpush1.msra.mxu0 %v154
    %443 = vmatprep.subr.mxu0 %v157
    %444 = vmatpush1.msra.mxu0 %v156
    %445 = vmatprep.subr.mxu0 %v159
    %446 = vmatpush1.msra.mxu0 %v158
    %447 = vmatprep.subr.mxu0 %v161
    %448 = vmatpush1.msra.mxu0 %v160
    %449 = vmatprep.subr.mxu0 %v163
    %450 = vmatpush1.msra.mxu0 %v162
    %451 = vmatprep.subr.mxu0 %v165
    %452 = vmatpush1.msra.mxu0 %v164
    %453 = vmatprep.subr.mxu0 %v167
    %454 = vmatpush1.msra.mxu0 %v166
    %455 = vmatprep.subr.mxu0 %v169
    %456 = vmatpush1.msra.mxu0 %v168
    %457 = vmatprep.mubr.f32.mxu0 %v173
    %458 = vmatmul.mubr.f32.gmra.mrb[0].mxu0 %v170
    %v459 = vpop.f32.mrb[0].mxu0
    %v460 = vadd.f32 %v389, %v459
    %v461 = vpop.f32.mrb[0].mxu0
    %v462 = vadd.f32 %v391, %v461
    %463 = vdwg.mxu0
    %v466 = vcombine.low %v320, %v321
    %468 = vst [vmem:[%s3] sm:$0xff] %v466
    %v471 = vcombine.low %v460, %v462
    %473 = vst [vmem:[%s3 + $0x8] sm:$0xff] %v471
    // Predicated region
    $region22: #{_lambda_.1} parent=1 // pred_check
      _
    $region23: #{_lambda_.1} parent=1 // pred_check_branch
      %475 = sbr.rel (0) target = $region25
    $region24: #{_lambda_.1} parent=1 // pred_region
      _
    $region25: #{_lambda_.1} parent=1 // pred_fallthru
      _
    // Predicated region
    $region26: #{_lambda_.1} parent=1 // pred_check
      _
    $region27: #{_lambda_.1} parent=1 // pred_check_branch
      %477 = sbr.rel (0) target = $region29
    $region28: #{_lambda_.1} parent=1 // pred_region
      _
    $region29: #{_lambda_.1} parent=1 // pred_fallthru
      _
    %478 = vsyncpa [#allocation3], 1
    %479 = vsyncpa [#allocation5], 1

</llo_original>
